<compile_context>
chip_gen: v7x
topology: tpu7x:2x2x1
jax: 0.10.0
libtpu: 0.0.40
codegen_flags: <defaults>
</compile_context>

<pallas_src>
import functools

import jax
import jax.numpy as jnp
from jax import lax
from jax.experimental import pallas as pl
from jax.experimental.pallas import tpu as pltpu

_MASK = -1e30   # "minus infinity" that never produces inf/nan arithmetic


def _round_up(x, m):
    return (x + m - 1) // m * m


def _simclr_kernel(rows_ref, cols_ref, part_ref, m_sc, l_sc,
                   *, inv_temp, n, tm, tn, n_padded):
    """One (row-tile i, col-tile k) step of the streamed off-diagonal LSE.

    rows_ref: (tm, Dp) bf16 query rows of cat([p1, p2])   (constant across k)
    cols_ref: (tn, Dp) bf16 key rows of cat([p1, p2]) for column tile k
    part_ref: (1, 8, 128) f32 per-row-tile partial sum of log(offdiag rowsum)
    m_sc, l_sc: (tm, 1) f32 running row max / rescaled row sum (VMEM scratch)
    """
    i = pl.program_id(0)
    k = pl.program_id(1)
    num_k = pl.num_programs(1)

    @pl.when(k == 0)
    def _init():
        m_sc[...] = jnp.full_like(m_sc, _MASK)
        l_sc[...] = jnp.zeros_like(l_sc)

    # (tm, tn) tile of (out @ out.T)/T: contract the feature axis of both
    # operands directly (no transpose); bf16 operands, f32 accumulation.
    s = lax.dot_general(
        rows_ref[...], cols_ref[...],
        dimension_numbers=(((1,), (1,)), ((), ())),
        preferred_element_type=jnp.float32) * inv_temp

    def _accumulate(s_tile):
        m_prev = m_sc[...]
        m_new = jnp.maximum(m_prev, jnp.max(s_tile, axis=-1, keepdims=True))
        alpha = jnp.exp(m_prev - m_new)
        l_sc[...] = alpha * l_sc[...] + jnp.sum(
            jnp.exp(s_tile - m_new), axis=-1, keepdims=True)
        m_sc[...] = m_new

    # Only the column tile(s) that contain the diagonal, and (if padded) the
    # last column tile, pay for iota/compare/select; every other tile takes
    # the clean path.
    has_pad = n_padded != n
    diag_here = jnp.logical_and(k * tn < (i + 1) * tm, (k + 1) * tn > i * tm)
    needs_mask = diag_here
    if has_pad:
        needs_mask = jnp.logical_or(needs_mask, k == num_k - 1)

    @pl.when(needs_mask)
    def _masked_tile():
        row_ids = lax.broadcasted_iota(jnp.int32, (tm, tn), 0) + i * tm
        col_ids = lax.broadcasted_iota(jnp.int32, (tm, tn), 1) + k * tn
        keep = col_ids != row_ids                       # drop the diagonal
        if has_pad:
            keep = jnp.logical_and(keep, col_ids < n)   # drop padded columns
        _accumulate(jnp.where(keep, s, _MASK))

    @pl.when(jnp.logical_not(needs_mask))
    def _clean_tile():
        _accumulate(s)

    @pl.when(k == num_k - 1)
    def _finalize():
        log_rowsum = m_sc[...] + jnp.log(l_sc[...])          # (tm, 1)
        if has_pad:
            row_ids = lax.broadcasted_iota(jnp.int32, (tm, 1), 0) + i * tm
            log_rowsum = jnp.where(row_ids < n, log_rowsum, 0.0)
        # Lane-dense scalar write-back of this row tile's partial sum.
        part_ref[...] = jnp.full((1, 8, 128), jnp.sum(log_rowsum), jnp.float32)


def simclr_loss(proj_1, proj_2, temperature):
    """Pallas-backed SimCLRLoss.forward for (B, D) projections."""
    B, D = proj_1.shape
    assert proj_2.shape == (B, D)
    n = 2 * B
    inv_temp = float(1.0 / temperature)

    out = jnp.concatenate([proj_1, proj_2], axis=0)          # (n, D)

    # Lane/sublane friendly padding; zero feature padding leaves dots intact.
    Dp = _round_up(max(D, 128), 128)
    tn = min(512, _round_up(n, 128))       # column tile
    Np = _round_up(n, tn)
    # Row tile: as large as possible (fewer HBM re-reads of the cols stream on
    # v5e/v6e), but keep >= 2 row tiles when possible so both v7x TensorCores
    # get work on the "parallel" row axis.  tm halves from tn, so tm | tn.
    tm = tn
    while Np // tm < 2 and tm % 16 == 0:
        tm //= 2

    # bf16 operands for the MXU; accumulation stays f32 inside the kernel.
    out_p = jnp.pad(out, ((0, Np - n), (0, Dp - D))).astype(jnp.bfloat16)

    num_row = Np // tm
    num_col = Np // tn

    kernel = functools.partial(
        _simclr_kernel, inv_temp=inv_temp, n=n, tm=tm, tn=tn, n_padded=Np)

    # VMEM budget from the actual block footprint (double-buffered bf16
    # inputs + output + scratch + (tm, tn) f32 temporaries) with 2x headroom,
    # capped below v7x's 64 MiB physical VMEM.
    block_bytes = (2 * tm * Dp * 2 + 2 * tn * Dp * 2 + 2 * 8 * 128 * 4
                   + 2 * tm * 4 + 4 * tm * tn * 4)
    vmem_limit = int(min(64 * 1024 * 1024,
                         max(16 * 1024 * 1024, 2 * block_bytes)))

    parts = pl.pallas_call(
        kernel,
        out_shape=jax.ShapeDtypeStruct((num_row, 8, 128), jnp.float32),
        grid_spec=pltpu.PrefetchScalarGridSpec(
            num_scalar_prefetch=0,
            grid=(num_row, num_col),
            in_specs=[
                pl.BlockSpec((tm, Dp), lambda i, k: (i, 0)),   # query rows
                pl.BlockSpec((tn, Dp), lambda i, k: (k, 0)),   # key/col rows
            ],
            out_specs=pl.BlockSpec((1, 8, 128), lambda i, k: (i, 0, 0)),
            scratch_shapes=[
                pltpu.VMEM((tm, 1), jnp.float32),   # running row max
                pltpu.VMEM((tm, 1), jnp.float32),   # running rescaled row sum
            ],
        ),
        compiler_params=pltpu.CompilerParams(
            dimension_semantics=("parallel", "arbitrary"),
            vmem_limit_bytes=vmem_limit,
        ),
    )(out_p, out_p)

    # O(n*D) positive-pair term + tiny reductions in plain JAX (f32):
    #   loss = mean_i [ log(sum_{j != i} exp(s_ij)) - <p1_i, p2_i>/T ]
    log_rowsum_total = jnp.sum(parts[:, 0, 0])
    pos_total = 2.0 * jnp.sum(proj_1.astype(jnp.float32)
                              * proj_2.astype(jnp.float32)) * inv_temp
    return (log_rowsum_total - pos_total) / n


def simclr_loss_ref(p1, p2, temperature):
    """Pure-JAX reference mirroring the PyTorch module exactly."""
    out = jnp.concatenate([p1, p2], axis=0)
    m = out.shape[0]
    sim = jnp.exp(out @ out.T / temperature)
    mask = ~jnp.eye(m, dtype=bool)
    row_sum = jnp.sum(jnp.where(mask, sim, 0.0), axis=-1)
    pos = jnp.exp(jnp.sum(p1 * p2, axis=-1) / temperature)
    pos = jnp.concatenate([pos, pos], axis=0)
    return jnp.mean(-jnp.log(pos / row_sum))


if __name__ == "__main__":
    # Small deterministic example: batch=8, feature dim=32, temperature=0.5.
    B, D = 8, 32
    temperature = 0.5

    key = jax.random.PRNGKey(0)
    k1, k2 = jax.random.split(key)
    proj_1 = jax.random.normal(k1, (B, D), dtype=jnp.float32)
    proj_2 = jax.random.normal(k2, (B, D), dtype=jnp.float32)

    loss_fn = jax.jit(functools.partial(simclr_loss, temperature=temperature))
    loss = loss_fn(proj_1, proj_2)
    jax.block_until_ready(loss)

    ref = simclr_loss_ref(proj_1, proj_2, temperature)
    assert bool(jnp.isfinite(loss)), "loss is not finite"
    tol = 1e-2 + 2e-2 * abs(float(ref))   # bf16 MXU operands, f32 accumulation
    assert abs(float(loss) - float(ref)) < tol, (float(loss), float(ref))

    print("KERNEL_OK")
</pallas_src>

<mosaic_0001>
module attributes {stable_mosaic.version = 11 : i64} {
  func.func @_simclr_kernel(%arg0: i32, %arg1: i32, %arg2: memref<64x128xbf16, #tpu.memory_space<vmem>>, %arg3: memref<128x128xbf16, #tpu.memory_space<vmem>>, %arg4: memref<1x8x128xf32, #tpu.memory_space<vmem>>, %arg5: memref<64x1xf32, #tpu.memory_space<vmem>>, %arg6: memref<64x1xf32, #tpu.memory_space<vmem>>) attributes {dimension_semantics = [#tpu.dimension_semantics<parallel>, #tpu.dimension_semantics<arbitrary>], iteration_bounds = array<i64: 2, 1>, scalar_prefetch = 0 : i64, scratch_operands = 2 : i64, tpu.core_type = #tpu.core_type<tc>, window_params = [{transform_indices = @transform_0, window_bounds = array<i64: 64, 128>}, {transform_indices = @transform_1, window_bounds = array<i64: 128, 128>}, {transform_indices = @transform_2, window_bounds = array<i64: 1, 8, 128>}]} {
    %c0_i32 = arith.constant 0 : i32
    %0 = arith.cmpi eq, %arg1, %c0_i32 : i32
    %1 = arith.extui %0 : i1 to i32
    %c0_i32_0 = arith.constant 0 : i32
    %2 = arith.cmpi ne, %1, %c0_i32_0 : i32
    scf.if %2 {
      %cst_13 = arith.constant -1.000000e+30 : f32
      %27 = vector.broadcast %cst_13 : f32 to vector<64x1xf32>
      %c0_14 = arith.constant 0 : index
      %c0_15 = arith.constant 0 : index
      %28 = vector.load %arg5[%c0_14, %c0_15] : memref<64x1xf32, #tpu.memory_space<vmem>>, vector<64x1xf32>
      tpu.vector_store %arg5[%c0_14, %c0_15], %27 {strides = array<i32>} : memref<64x1xf32, #tpu.memory_space<vmem>>, vector<64x1xf32>,
      %cst_16 = arith.constant 0.000000e+00 : f32
      %29 = vector.broadcast %cst_16 : f32 to vector<64x1xf32>
      %c0_17 = arith.constant 0 : index
      %c0_18 = arith.constant 0 : index
      %30 = vector.load %arg6[%c0_17, %c0_18] : memref<64x1xf32, #tpu.memory_space<vmem>>, vector<64x1xf32>
      tpu.vector_store %arg6[%c0_17, %c0_18], %29 {strides = array<i32>} : memref<64x1xf32, #tpu.memory_space<vmem>>, vector<64x1xf32>,
    } else {
    }
    %c0 = arith.constant 0 : index
    %c0_1 = arith.constant 0 : index
    %3 = vector.load %arg2[%c0, %c0_1] : memref<64x128xbf16, #tpu.memory_space<vmem>>, vector<64x128xbf16>
    %c0_2 = arith.constant 0 : index
    %c0_3 = arith.constant 0 : index
    %4 = vector.load %arg3[%c0_2, %c0_3] : memref<128x128xbf16, #tpu.memory_space<vmem>>, vector<128x128xbf16>
    %cst = arith.constant dense<0.000000e+00> : vector<64x128xf32>
    %5 = tpu.matmul %3, %4, %cst {dimension_numbers = #tpu.dot_dimension_numbers<[1], [1], [0], [0], [0, 0, 1, 0], [], []>} : vector<64x128xbf16>, vector<128x128xbf16>, vector<64x128xf32> -> vector<64x128xf32>
    %cst_4 = arith.constant 2.000000e+00 : f32
    %6 = vector.broadcast %cst_4 : f32 to vector<64x128xf32>
    %7 = arith.mulf %5, %6 : vector<64x128xf32>
    %c128_i32 = arith.constant 128 : i32
    %8 = arith.muli %arg1, %c128_i32 : i32
    %c1_i32 = arith.constant 1 : i32
    %9 = arith.addi %arg0, %c1_i32 : i32
    %c64_i32 = arith.constant 64 : i32
    %10 = arith.muli %9, %c64_i32 : i32
    %11 = arith.cmpi slt, %8, %10 : i32
    %c1_i32_5 = arith.constant 1 : i32
    %12 = arith.addi %arg1, %c1_i32_5 : i32
    %c128_i32_6 = arith.constant 128 : i32
    %13 = arith.muli %12, %c128_i32_6 : i32
    %c64_i32_7 = arith.constant 64 : i32
    %14 = arith.muli %arg0, %c64_i32_7 : i32
    %15 = arith.cmpi sgt, %13, %14 : i32
    %16 = arith.andi %11, %15 : i1
    %c0_i32_8 = arith.constant 0 : i32
    %17 = arith.cmpi eq, %arg1, %c0_i32_8 : i32
    %18 = arith.ori %16, %17 : i1
    %19 = arith.extui %18 : i1 to i32
    %c0_i32_9 = arith.constant 0 : i32
    %20 = arith.cmpi ne, %19, %c0_i32_9 : i32
    scf.if %20 {
      %27 = tpu.iota {dimensions = array<i32: 0>} : vector<64x128xi32>
      %c64_i32_13 = arith.constant 64 : i32
      %28 = arith.muli %arg0, %c64_i32_13 : i32
      %29 = vector.broadcast %28 : i32 to vector<64x128xi32>
      %30 = arith.addi %27, %29 : vector<64x128xi32>
      %31 = tpu.iota {dimensions = array<i32: 1>} : vector<64x128xi32>
      %c128_i32_14 = arith.constant 128 : i32
      %32 = arith.muli %arg1, %c128_i32_14 : i32
      %33 = vector.broadcast %32 : i32 to vector<64x128xi32>
      %34 = arith.addi %31, %33 : vector<64x128xi32>
      %35 = arith.cmpi ne, %34, %30 : vector<64x128xi32>
      %c16_i32 = arith.constant 16 : i32
      %36 = vector.broadcast %c16_i32 : i32 to vector<64x128xi32>
      %37 = arith.cmpi slt, %34, %36 : vector<64x128xi32>
      %38 = arith.andi %35, %37 : vector<64x128xi1>
      %cst_15 = arith.constant -1.000000e+30 : f32
      %39 = vector.broadcast %cst_15 : f32 to vector<64x128xf32>
      %40 = arith.select %38, %7, %39 : vector<64x128xi1>, vector<64x128xf32>
      %c0_16 = arith.constant 0 : index
      %c0_17 = arith.constant 0 : index
      %41 = vector.load %arg5[%c0_16, %c0_17] : memref<64x1xf32, #tpu.memory_space<vmem>>, vector<64x1xf32>
      %cst_18 = arith.constant dense<0xFF800000> : vector<64xf32>
      %42 = vector.multi_reduction <maximumf>, %40, %cst_18 [1] : vector<64x128xf32> to vector<64xf32>
      %43 = vector.shape_cast %42 : vector<64xf32> to vector<64x1xf32>
      %44 = arith.maximumf %41, %43 : vector<64x1xf32>
      %45 = arith.subf %41, %44 : vector<64x1xf32>
      %46 = math.exp %45 : vector<64x1xf32>
      %c0_19 = arith.constant 0 : index
      %c0_20 = arith.constant 0 : index
      %47 = vector.load %arg6[%c0_19, %c0_20] : memref<64x1xf32, #tpu.memory_space<vmem>>, vector<64x1xf32>
      %48 = arith.mulf %46, %47 : vector<64x1xf32>
      %49 = vector.broadcast %44 : vector<64x1xf32> to vector<64x128xf32>
      %50 = arith.subf %40, %49 : vector<64x128xf32>
      %51 = math.exp %50 : vector<64x128xf32>
      %cst_21 = arith.constant dense<0.000000e+00> : vector<64xf32>
      %52 = vector.multi_reduction <add>, %51, %cst_21 [1] : vector<64x128xf32> to vector<64xf32>
      %53 = vector.shape_cast %52 : vector<64xf32> to vector<64x1xf32>
      %54 = arith.addf %48, %53 : vector<64x1xf32>
      %c0_22 = arith.constant 0 : index
      %c0_23 = arith.constant 0 : index
      %55 = vector.load %arg6[%c0_22, %c0_23] : memref<64x1xf32, #tpu.memory_space<vmem>>, vector<64x1xf32>
      tpu.vector_store %arg6[%c0_22, %c0_23], %54 {strides = array<i32>} : memref<64x1xf32, #tpu.memory_space<vmem>>, vector<64x1xf32>,
      %c0_24 = arith.constant 0 : index
      %c0_25 = arith.constant 0 : index
      %56 = vector.load %arg5[%c0_24, %c0_25] : memref<64x1xf32, #tpu.memory_space<vmem>>, vector<64x1xf32>
      tpu.vector_store %arg5[%c0_24, %c0_25], %44 {strides = array<i32>} : memref<64x1xf32, #tpu.memory_space<vmem>>, vector<64x1xf32>,
    } else {
    }
    %true = arith.constant true
    %21 = arith.xori %18, %true : i1
    %22 = arith.extui %21 : i1 to i32
    %c0_i32_10 = arith.constant 0 : i32
    %23 = arith.cmpi ne, %22, %c0_i32_10 : i32
    scf.if %23 {
      %c0_13 = arith.constant 0 : index
      %c0_14 = arith.constant 0 : index
      %27 = vector.load %arg5[%c0_13, %c0_14] : memref<64x1xf32, #tpu.memory_space<vmem>>, vector<64x1xf32>
      %cst_15 = arith.constant dense<0xFF800000> : vector<64xf32>
      %28 = vector.multi_reduction <maximumf>, %7, %cst_15 [1] : vector<64x128xf32> to vector<64xf32>
      %29 = vector.shape_cast %28 : vector<64xf32> to vector<64x1xf32>
      %30 = arith.maximumf %27, %29 : vector<64x1xf32>
      %31 = arith.subf %27, %30 : vector<64x1xf32>
      %32 = math.exp %31 : vector<64x1xf32>
      %c0_16 = arith.constant 0 : index
      %c0_17 = arith.constant 0 : index
      %33 = vector.load %arg6[%c0_16, %c0_17] : memref<64x1xf32, #tpu.memory_space<vmem>>, vector<64x1xf32>
      %34 = arith.mulf %32, %33 : vector<64x1xf32>
      %35 = vector.broadcast %30 : vector<64x1xf32> to vector<64x128xf32>
      %36 = arith.subf %7, %35 : vector<64x128xf32>
      %37 = math.exp %36 : vector<64x128xf32>
      %cst_18 = arith.constant dense<0.000000e+00> : vector<64xf32>
      %38 = vector.multi_reduction <add>, %37, %cst_18 [1] : vector<64x128xf32> to vector<64xf32>
      %39 = vector.shape_cast %38 : vector<64xf32> to vector<64x1xf32>
      %40 = arith.addf %34, %39 : vector<64x1xf32>
      %c0_19 = arith.constant 0 : index
      %c0_20 = arith.constant 0 : index
      %41 = vector.load %arg6[%c0_19, %c0_20] : memref<64x1xf32, #tpu.memory_space<vmem>>, vector<64x1xf32>
      tpu.vector_store %arg6[%c0_19, %c0_20], %40 {strides = array<i32>} : memref<64x1xf32, #tpu.memory_space<vmem>>, vector<64x1xf32>,
      %c0_21 = arith.constant 0 : index
      %c0_22 = arith.constant 0 : index
      %42 = vector.load %arg5[%c0_21, %c0_22] : memref<64x1xf32, #tpu.memory_space<vmem>>, vector<64x1xf32>
      tpu.vector_store %arg5[%c0_21, %c0_22], %30 {strides = array<i32>} : memref<64x1xf32, #tpu.memory_space<vmem>>, vector<64x1xf32>,
    } else {
    }
    %c0_i32_11 = arith.constant 0 : i32
    %24 = arith.cmpi eq, %arg1, %c0_i32_11 : i32
    %25 = arith.extui %24 : i1 to i32
    %c0_i32_12 = arith.constant 0 : i32
    %26 = arith.cmpi ne, %25, %c0_i32_12 : i32
    scf.if %26 {
      %c0_13 = arith.constant 0 : index
      %c0_14 = arith.constant 0 : index
      %27 = vector.load %arg5[%c0_13, %c0_14] : memref<64x1xf32, #tpu.memory_space<vmem>>, vector<64x1xf32>
      %c0_15 = arith.constant 0 : index
      %c0_16 = arith.constant 0 : index
      %28 = vector.load %arg6[%c0_15, %c0_16] : memref<64x1xf32, #tpu.memory_space<vmem>>, vector<64x1xf32>
      %29 = math.log %28 : vector<64x1xf32>
      %30 = arith.addf %27, %29 : vector<64x1xf32>
      %31 = tpu.iota {dimensions = array<i32: 0>} : vector<64x1xi32>
      %c64_i32_17 = arith.constant 64 : i32
      %32 = arith.muli %arg0, %c64_i32_17 : i32
      %33 = vector.broadcast %32 : i32 to vector<64x1xi32>
      %34 = arith.addi %31, %33 : vector<64x1xi32>
      %c16_i32 = arith.constant 16 : i32
      %35 = vector.broadcast %c16_i32 : i32 to vector<64x1xi32>
      %36 = arith.cmpi slt, %34, %35 : vector<64x1xi32>
      %cst_18 = arith.constant 0.000000e+00 : f32
      %37 = vector.broadcast %cst_18 : f32 to vector<64x1xf32>
      %38 = arith.select %36, %30, %37 : vector<64x1xi1>, vector<64x1xf32>
      %39 = vector.shape_cast %38 : vector<64x1xf32> to vector<1x64x1xf32>
      %cst_19 = arith.constant dense<0.000000e+00> : vector<1xf32>
      %40 = vector.multi_reduction <add>, %39, %cst_19 [1, 2] : vector<1x64x1xf32> to vector<1xf32>
      %41 = vector.shape_cast %40 : vector<1xf32> to vector<1x1x1xf32>
      %42 = vector.extract %41[0, 0, 0] : f32 from vector<1x1x1xf32>
      %43 = vector.broadcast %42 : f32 to vector<1x8x128xf32>
      %c0_20 = arith.constant 0 : index
      %c0_21 = arith.constant 0 : index
      %c0_22 = arith.constant 0 : index
      %44 = vector.load %arg4[%c0_20, %c0_21, %c0_22] : memref<1x8x128xf32, #tpu.memory_space<vmem>>, vector<1x8x128xf32>
      tpu.vector_store %arg4[%c0_20, %c0_21, %c0_22], %43 {strides = array<i32>} : memref<1x8x128xf32, #tpu.memory_space<vmem>>, vector<1x8x128xf32>,
    } else {
    }
    return
  }
  func.func @transform_0(%arg0: i32, %arg1: i32) -> (i32, i32) {
    %c0_i32 = arith.constant 0 : i32
    %c0_i32_0 = arith.constant 0 : i32
    return %arg0, %c0_i32 : i32, i32
  }
  func.func @transform_1(%arg0: i32, %arg1: i32) -> (i32, i32) {
    %c0_i32 = arith.constant 0 : i32
    %c0_i32_0 = arith.constant 0 : i32
    return %arg1, %c0_i32 : i32, i32
  }
  func.func @transform_2(%arg0: i32, %arg1: i32) -> (i32, i32, i32) {
    %c0_i32 = arith.constant 0 : i32
    %c0_i32_0 = arith.constant 0 : i32
    %c0_i32_1 = arith.constant 0 : i32
    return %arg0, %c0_i32, %c0_i32_0 : i32, i32, i32
  }
}

</mosaic_0001>

<llo_original>
// kernel: simclr_loss.1
$region0: #{simclr_loss.1}
  #allocation0 [shape = 'u32[]', space=smem, size = 0x4, offset = 0x4, fixed_abs, tag = 'smem constant byte address 0x4 - core index']
  #allocation1 [shape = 'u32[144,128]{1,0:T(1,128)}', space=vmem, size = 0x12000, scoped, tag = 'internal scratch']
  #allocation2 [shape = 'f32[64,1]{1,0:T(8,128)}', space=vmem, size = 0x8000, scoped, tag = 'scratch operand']
  #allocation3 [shape = 'f32[64,1]{1,0:T(8,128)}', space=vmem, size = 0x8000, scoped, tag = 'scratch operand']
  %s0 = inlined_call_operand.vmem [shape: bf16[128,128], index: 0, kind: input, shape index: {}, may-alias: {0,1}]
  %s1 = inlined_call_operand.vmem [shape: bf16[128,128], index: 1, kind: input, shape index: {}, may-alias: {0,1}]
  %s2 = inlined_call_operand.vmem [shape: f32[2,8,128], index: 2, kind: output, shape index: {}]
  %s3 = sld [smem:[#allocation0]]
  $region57: #{simclr_loss.1} parent=0
    _
  %s5 = ssub.s32 1, %s3
  %s6 = scalar_select 0, %s5, %s3
  loop: start=0, step=1, limit=4
  $region2: #{simclr_loss.1} parent=0 // loop_pre_header
    _
  $region3: #{simclr_loss.1} parent=0 // loop_header
    %s8 = sphi 0, %s12
    %p9 = scmp.ge.s32.totalorder %s8, 4
    %s15 = sphi 0, %s27
    %s16 = sphi 0, %s23
    %s17 = sphi 0, %s15
    %s18 = sphi 0, %s16
    %s19 = sphi 0, %s17
    %s20 = sphi 0, %s18
    %s30 = sphi 0, %s32
    %s33 = sphi 0, %s30
    %s34 = sphi 0, %s33
    %s50 = sphi 0, %s34
    %s56 = sphi 0, %s58
    %s59 = sphi 0, %s56
    %s60 = sphi 0, %s59
    %s76 = sphi 0, %s60
    %s82 = sphi 0, %s84
    %s85 = sphi 0, %s82
    %s86 = sphi 0, %s85
    %s102 = sphi 0, %s86
  $region4: #{simclr_loss.1} parent=0 // loop_header_branch
    %11 = sbr.rel (%p9) target = $region8
  $region5: #{simclr_loss.1} parent=0 // loop_body
    %s13 = ssub.s32 %s8, 1
    %s14 = ssub.s32 %s8, 2
    %s21 = sadd.s32 1, %s16
    %p22 = scmp.ge.s32.totalorder %s21, 1
    %s23 = scalar_select %p22, 0, %s21
    %s24 = sadd.s32 1, %s15
    %s25 = scalar_select %p22, %s24, %s15
    %p26 = scmp.ge.s32.totalorder %s25, 2
    %s27 = scalar_select %p26, 0, %s25
    %s28 = ssub.s32 %s15, %s27
    %p29 = scmp.eq.s32.totalorder %s28, 0
    %s31 = sadd.s32 %s30, 1
    %s32 = scalar_select %p29, %s30, %s31
    %p35 = pneg %p29
    %p36 = scmp.eq.s32.totalorder %s8, 1
    %p37 = por %p35, %p36
    %p38 = scmp.ne.s32.totalorder %s30, %s33
    %p39 = scmp.eq.s32.totalorder %s8, 0
    %p40 = por %p38, %p39
    %p41 = scmp.ne.s32.totalorder %s30, %s33
    %p42 = scmp.eq.s32.totalorder %s13, 1
    %p43 = por %p41, %p42
    %p44 = scmp.ne.s32.totalorder %s33, %s34
    %p45 = scmp.eq.s32.totalorder %s13, 0
    %p46 = por %p44, %p45
    %p47 = scmp.ne.s32.totalorder %s33, %s34
    %p48 = scmp.eq.s32.totalorder %s14, 1
    %p49 = por %p47, %p48
    %p51 = scmp.ne.s32.totalorder %s34, %s50
    %p52 = scmp.eq.s32.totalorder %s14, 0
    %p53 = por %p51, %p52
    %s54 = ssub.s32 %s16, %s23
    %p55 = scmp.eq.s32.totalorder %s54, 0
    %s57 = sadd.s32 %s56, 1
    %s58 = scalar_select %p55, %s56, %s57
    %p61 = pneg %p55
    %p62 = scmp.eq.s32.totalorder %s8, 1
    %p63 = por %p61, %p62
    %p64 = scmp.ne.s32.totalorder %s56, %s59
    %p65 = scmp.eq.s32.totalorder %s8, 0
    %p66 = por %p64, %p65
    %p67 = scmp.ne.s32.totalorder %s56, %s59
    %p68 = scmp.eq.s32.totalorder %s13, 1
    %p69 = por %p67, %p68
    %p70 = scmp.ne.s32.totalorder %s59, %s60
    %p71 = scmp.eq.s32.totalorder %s13, 0
    %p72 = por %p70, %p71
    %p73 = scmp.ne.s32.totalorder %s59, %s60
    %p74 = scmp.eq.s32.totalorder %s14, 1
    %p75 = por %p73, %p74
    %p77 = scmp.ne.s32.totalorder %s60, %s76
    %p78 = scmp.eq.s32.totalorder %s14, 0
    %p79 = por %p77, %p78
    %s80 = ssub.s32 %s15, %s27
    %p81 = scmp.eq.s32.totalorder %s80, 0
    %s83 = sadd.s32 %s82, 1
    %s84 = scalar_select %p81, %s82, %s83
    %p87 = pneg %p81
    %p88 = scmp.eq.s32.totalorder %s8, 1
    %p89 = por %p87, %p88
    %p90 = scmp.ne.s32.totalorder %s82, %s85
    %p91 = scmp.eq.s32.totalorder %s8, 0
    %p92 = por %p90, %p91
    %p93 = scmp.ne.s32.totalorder %s82, %s85
    %p94 = scmp.eq.s32.totalorder %s13, 1
    %p95 = por %p93, %p94
    %p96 = scmp.ne.s32.totalorder %s85, %s86
    %p97 = scmp.eq.s32.totalorder %s13, 0
    %p98 = por %p96, %p97
    %p99 = scmp.ne.s32.totalorder %s85, %s86
    %p100 = scmp.eq.s32.totalorder %s14, 1
    %p101 = por %p99, %p100
    %p103 = scmp.ne.s32.totalorder %s86, %s102
    %p104 = scmp.eq.s32.totalorder %s14, 0
    %p105 = por %p103, %p104
    %p106 = scmp.le.s32.totalorder 1, %s8
    %p107 = scmp.lt.s32.totalorder %s8, 3
    %p108 = pnand %p106, %p107
    %p109 = pneg %p108
    // Predicated region
    $region9: #{simclr_loss.1} parent=5 // pred_check
      _
    $region10: #{simclr_loss.1} parent=5 // pred_check_branch
      %111 = sbr.rel (%p108) target = $region12
    $region11: #{simclr_loss.1} parent=5 // pred_region
      %s112 = ssub.s32 %s8, 1
      // Predicated region
      $region13: #{simclr_loss.1} parent=11 // pred_check
        %p113 = pneg %p72
      $region14: #{simclr_loss.1} parent=11 // pred_check_branch
        %115 = sbr.rel (%p113) target = $region16
      $region15: #{simclr_loss.1} parent=11 // pred_region
        %s116 = smul.u32 16, %s18
        %p117 = scmp.lt.s32.totalorder %s116, 15
        %s118 = scalar_select %p117, %s116, 15
        %s119 = smul.addr %s118, 4
        %s120 = scalar_lea.vmem %s1, %s119
        %s121 = smul.u32 16, %s18
      $region16: #{simclr_loss.1} parent=11 // pred_fallthru
        _
    $region12: #{simclr_loss.1} parent=5 // pred_fallthru
      _
    %p122 = scmp.lt.s32.totalorder %s8, 2
    // Predicated region
    $region17: #{simclr_loss.1} parent=5 // pred_check
      %p123 = pneg %p122
    $region18: #{simclr_loss.1} parent=5 // pred_check_branch
      %125 = sbr.rel (%p123) target = $region20
    $region19: #{simclr_loss.1} parent=5 // pred_region
      // Predicated region
      $region21: #{simclr_loss.1} parent=19 // pred_check
        %p126 = pneg %p40
      $region22: #{simclr_loss.1} parent=19 // pred_check_branch
        %128 = sbr.rel (%p126) target = $region24
      $region23: #{simclr_loss.1} parent=19 // pred_region
        %s129 = smul.u32 8, %s15
        %p130 = scmp.lt.s32.totalorder %s129, 15
        %s131 = scalar_select %p130, %s129, 15
        %s132 = smul.addr %s131, 4
        %s133 = scalar_lea.vmem %s0, %s132
        %s134 = smul.u32 8, %s15
      $region24: #{simclr_loss.1} parent=19 // pred_fallthru
        _
    $region20: #{simclr_loss.1} parent=5 // pred_fallthru
      _
    %p135 = scmp.le.s32.totalorder 1, %s8
    %p136 = scmp.lt.s32.totalorder %s8, 3
    %p137 = pnand %p135, %p136
    %p138 = pneg %p137
    // Predicated region
    $region25: #{simclr_loss.1} parent=5 // pred_check
      _
    $region26: #{simclr_loss.1} parent=5 // pred_check_branch
      %140 = sbr.rel (%p137) target = $region28
    $region27: #{simclr_loss.1} parent=5 // pred_region
      %s141 = ssub.s32 %s8, 1
      %s142 = smul.u32 8, %s17
      %p143 = scmp.lt.s32.totalorder %s142, 15
      %s144 = scalar_select %p143, %s142, 15
      %s145 = smul.addr %s144, 4
      %s146 = scalar_lea.vmem %s0, %s145
      %p147 = pneg %p46
      %p148 = pneg %p43
      %s149 = smul.u32 16, %s18
      %p150 = scmp.lt.s32.totalorder %s149, 15
      %s151 = scalar_select %p150, %s149, 15
      %s152 = smul.addr %s151, 4
      %s153 = scalar_lea.vmem %s1, %s152
      %p154 = pneg %p72
      %p155 = pneg %p69
      %p156 = pneg %p98
      %p157 = pneg %p95
      %p158 = scmp.lt.s32.totalorder %s17, 1
      %s159 = scalar_select %p158, %s17, 1
      %s160 = smul.addr %s159, 8
      %s161 = scalar_lea.vmem %s2, %s160
      %s162 = smul.u32 8, %s17
      %p163 = scmp.lt.s32.totalorder %s162, 15
      %s164 = scalar_select %p163, %s162, 15
      %s165 = smul.addr %s164, 4
      %s166 = scalar_lea.vmem %s0, %s165
      %s167 = smul.u32 8, %s17
      %s168 = smul.u32 16, %s18
      %p169 = scmp.lt.s32.totalorder %s168, 15
      %s170 = scalar_select %p169, %s168, 15
      %s171 = smul.addr %s170, 4
      %s172 = scalar_lea.vmem %s1, %s171
      %s173 = smul.u32 16, %s18
      %p174 = scmp.lt.s32.totalorder %s17, 1
      %s175 = scalar_select %p174, %s17, 1
      %s176 = smul.addr %s175, 8
      %s177 = scalar_lea.vmem %s2, %s176
      %p179 = scmp.eq.s32.totalorder %s18, 0
      // Predicated region
      $region29: #{simclr_loss.1} parent=27 // pred_check
        %p180 = pneg %p179
      $region30: #{simclr_loss.1} parent=27 // pred_check_branch
        %182 = sbr.rel (%p180) target = $region32
      $region31: #{simclr_loss.1} parent=27 // pred_region
        %vm183 = vcmask 7168
        %184 = vst.msk [vmem:[#allocation2] sm:$0xff] %vm183, -1e+30
        %185 = vst.msk [vmem:[#allocation2 + $0x8] sm:$0xff] %vm183, -1e+30
        %186 = vst.msk [vmem:[#allocation2 + $0x10] sm:$0xff] %vm183, -1e+30
        %187 = vst.msk [vmem:[#allocation2 + $0x18] sm:$0xff] %vm183, -1e+30
        %188 = vst.msk [vmem:[#allocation2 + $0x20] sm:$0xff] %vm183, -1e+30
        %189 = vst.msk [vmem:[#allocation2 + $0x28] sm:$0xff] %vm183, -1e+30
        %190 = vst.msk [vmem:[#allocation2 + $0x30] sm:$0xff] %vm183, -1e+30
        %191 = vst.msk [vmem:[#allocation2 + $0x38] sm:$0xff] %vm183, -1e+30
        %192 = vst.msk [vmem:[#allocation3] sm:$0xff] %vm183, 0.0
        %193 = vst.msk [vmem:[#allocation3 + $0x8] sm:$0xff] %vm183, 0.0
        %194 = vst.msk [vmem:[#allocation3 + $0x10] sm:$0xff] %vm183, 0.0
        %195 = vst.msk [vmem:[#allocation3 + $0x18] sm:$0xff] %vm183, 0.0
        %196 = vst.msk [vmem:[#allocation3 + $0x20] sm:$0xff] %vm183, 0.0
        %197 = vst.msk [vmem:[#allocation3 + $0x28] sm:$0xff] %vm183, 0.0
        %198 = vst.msk [vmem:[#allocation3 + $0x30] sm:$0xff] %vm183, 0.0
        %199 = vst.msk [vmem:[#allocation3 + $0x38] sm:$0xff] %vm183, 0.0
      $region32: #{simclr_loss.1} parent=27 // pred_fallthru
        _
      %v200 = vld [vmem:[%s166] sm:$0xf]
      %v201 = vld [vmem:[%s166 + $0x4] sm:$0xf]
      %v202 = vld [vmem:[%s166 + $0x8] sm:$0xf]
      %v203 = vld [vmem:[%s166 + $0xc] sm:$0xf]
      %v204 = vld [vmem:[%s166 + $0x10] sm:$0xf]
      %v205 = vld [vmem:[%s166 + $0x14] sm:$0xf]
      %v206 = vld [vmem:[%s166 + $0x18] sm:$0xf]
      %v207 = vld [vmem:[%s166 + $0x1c] sm:$0xf]
      %v208 = vld [vmem:[%s172] sm:$0xf]
      %v209 = vld [vmem:[%s172 + $0x4] sm:$0xf]
      %v210 = vld [vmem:[%s172 + $0x8] sm:$0xf]
      %v211 = vld [vmem:[%s172 + $0xc] sm:$0xf]
      %v212 = vld [vmem:[%s172 + $0x10] sm:$0xf]
      %v213 = vld [vmem:[%s172 + $0x14] sm:$0xf]
      %v214 = vld [vmem:[%s172 + $0x18] sm:$0xf]
      %v215 = vld [vmem:[%s172 + $0x1c] sm:$0xf]
      %v216 = vld [vmem:[%s172 + $0x20] sm:$0xf]
      %v217 = vld [vmem:[%s172 + $0x24] sm:$0xf]
      %v218 = vld [vmem:[%s172 + $0x28] sm:$0xf]
      %v219 = vld [vmem:[%s172 + $0x2c] sm:$0xf]
      %v220 = vld [vmem:[%s172 + $0x30] sm:$0xf]
      %v221 = vld [vmem:[%s172 + $0x34] sm:$0xf]
      %v222 = vld [vmem:[%s172 + $0x38] sm:$0xf]
      %v223 = vld [vmem:[%s172 + $0x3c] sm:$0xf]
      %v232 = vunpack.c.l.b16 %v200
      %v233 = vunpack.c.l.b16 %v201
      %v234 = vunpack.c.l.b16 %v202
      %v235 = vunpack.c.l.b16 %v203
      %v236 = vunpack.c.l.b16 %v204
      %v237 = vunpack.c.l.b16 %v205
      %v238 = vunpack.c.l.b16 %v206
      %v239 = vunpack.c.l.b16 %v207
      %v240 = vpack.c.b16 %v233, %v232
      %v241 = vpack.c.b16 %v235, %v234
      %v242 = vpack.c.b16 %v237, %v236
      %v243 = vpack.c.b16 %v239, %v238
      %v264 = vunpack.c.l.b16 %v208
      %v265 = vunpack.c.l.b16 %v209
      %v266 = vunpack.c.l.b16 %v210
      %v267 = vunpack.c.l.b16 %v211
      %v268 = vunpack.c.l.b16 %v212
      %v269 = vunpack.c.l.b16 %v213
      %v270 = vunpack.c.l.b16 %v214
      %v271 = vunpack.c.l.b16 %v215
      %v272 = vunpack.c.l.b16 %v216
      %v273 = vunpack.c.l.b16 %v217
      %v274 = vunpack.c.l.b16 %v218
      %v275 = vunpack.c.l.b16 %v219
      %v276 = vunpack.c.l.b16 %v220
      %v277 = vunpack.c.l.b16 %v221
      %v278 = vunpack.c.l.b16 %v222
      %v279 = vunpack.c.l.b16 %v223
      %v280 = vpack.c.b16 %v265, %v264
      %v281 = vpack.c.b16 %v267, %v266
      %v282 = vpack.c.b16 %v269, %v268
      %v283 = vpack.c.b16 %v271, %v270
      %v284 = vpack.c.b16 %v273, %v272
      %v285 = vpack.c.b16 %v275, %v274
      %v286 = vpack.c.b16 %v277, %v276
      %v287 = vpack.c.b16 %v279, %v278
      %296 = vmatprep.subr.bf16.mxu0 0
      %297 = vmatpush1.bf16.xpose.msra.mxu0 %v280
      %298 = vmatprep.subr.bf16.mxu0 0
      %299 = vmatpush1.bf16.xpose.msra.mxu0 %v281
      %300 = vmatprep.subr.bf16.mxu0 0
      %301 = vmatpush1.bf16.xpose.msra.mxu0 %v282
      %302 = vmatprep.subr.bf16.mxu0 0
      %303 = vmatpush1.bf16.xpose.msra.mxu0 %v283
      %304 = vmatprep.subr.bf16.mxu0 0
      %305 = vmatpush1.bf16.xpose.msra.mxu0 %v284
      %306 = vmatprep.subr.bf16.mxu0 0
      %307 = vmatpush1.bf16.xpose.msra.mxu0 %v285
      %308 = vmatprep.subr.bf16.mxu0 0
      %309 = vmatpush1.bf16.xpose.msra.mxu0 %v286
      %310 = vmatprep.subr.bf16.mxu0 0
      %311 = vmatpush1.bf16.xpose.msra.mxu0 %v287
      %312 = vmatprep.subr.bf16.mxu0 0
      %313 = vmatpush1.bf16.xpose.msra.mxu0 0
      %314 = vmatprep.subr.bf16.mxu0 0
      %315 = vmatpush1.bf16.xpose.msra.mxu0 0
      %316 = vmatprep.subr.bf16.mxu0 0
      %317 = vmatpush1.bf16.xpose.msra.mxu0 0
      %318 = vmatprep.subr.bf16.mxu0 0
      %319 = vmatpush1.bf16.xpose.msra.mxu0 0
      %320 = vmatprep.subr.bf16.mxu0 0
      %321 = vmatpush1.bf16.xpose.msra.mxu0 0
      %322 = vmatprep.subr.bf16.mxu0 0
      %323 = vmatpush1.bf16.xpose.msra.mxu0 0
      %324 = vmatprep.subr.bf16.mxu0 0
      %325 = vmatpush1.bf16.xpose.msra.mxu0 0
      %326 = vmatprep.subr.bf16.mxu0 0
      %327 = vmatpush1.bf16.xpose.msra.mxu0 0
      %328 = vmatprep.mubr.bf16.mxu0 0
      %329 = vmatmul.mubr.bf16.gmra.mrb[0].mxu0 %v240
      %v330 = vpop.f32.mrb[0].mxu0
      %v331 = vadd.f32 0.0, %v330
      %v332 = vpop.f32.mrb[0].mxu0
      %v333 = vpop.f32.mrb[0].mxu0
      %v334 = vadd.f32 0.0, %v333
      %v335 = vpop.f32.mrb[0].mxu0
      %336 = vmatprep.mubr.bf16.mxu0 0
      %337 = vmatmul.mubr.bf16.gmra.mrb[0].mxu0 %v241
      %v338 = vpop.f32.mrb[0].mxu0
      %v339 = vadd.f32 0.0, %v338
      %v340 = vpop.f32.mrb[0].mxu0
      %v341 = vpop.f32.mrb[0].mxu0
      %v342 = vadd.f32 0.0, %v341
      %v343 = vpop.f32.mrb[0].mxu0
      %344 = vmatprep.mubr.bf16.mxu0 0
      %345 = vmatmul.mubr.bf16.gmra.mrb[0].mxu0 %v242
      %v346 = vpop.f32.mrb[0].mxu0
      %v347 = vadd.f32 0.0, %v346
      %v348 = vpop.f32.mrb[0].mxu0
      %v349 = vpop.f32.mrb[0].mxu0
      %v350 = vadd.f32 0.0, %v349
      %v351 = vpop.f32.mrb[0].mxu0
      %352 = vmatprep.mubr.bf16.mxu0 0
      %353 = vmatmul.mubr.bf16.gmra.mrb[0].mxu0 %v243
      %v354 = vpop.f32.mrb[0].mxu0
      %v355 = vadd.f32 0.0, %v354
      %v356 = vpop.f32.mrb[0].mxu0
      %v357 = vpop.f32.mrb[0].mxu0
      %v358 = vadd.f32 0.0, %v357
      %v359 = vpop.f32.mrb[0].mxu0
      %360 = vdwg.mxu0
      %v361 = vmul.f32 %v331, 2.0
      %v362 = vmul.f32 %v334, 2.0
      %v363 = vmul.f32 %v339, 2.0
      %v364 = vmul.f32 %v342, 2.0
      %v365 = vmul.f32 %v347, 2.0
      %v366 = vmul.f32 %v350, 2.0
      %v367 = vmul.f32 %v355, 2.0
      %v368 = vmul.f32 %v358, 2.0
      %s369 = smul.u32 %s18, 128
      %s370 = sadd.s32 %s17, 1
      %s371 = smul.u32 %s370, 64
      %p372 = scmp.lt.s32.totalorder %s369, %s371
      %s373 = sadd.s32 %s18, 1
      %s374 = smul.u32 %s373, 128
      %s375 = smul.u32 %s17, 64
      %p376 = scmp.gt.s32.totalorder %s374, %s375
      %p377 = pnand %p372, %p376
      %p378 = pneg %p377
      %p379 = por %p378, %p179
      // Predicated region
      $region33: #{simclr_loss.1} parent=27 // pred_check
        %p380 = pneg %p379
      $region34: #{simclr_loss.1} parent=27 // pred_check_branch
        %382 = sbr.rel (%p380) target = $region36
      $region35: #{simclr_loss.1} parent=27 // pred_region
        %v383 = vlaneseq
        %v384 = vshrl.u32 %v383, 7
        %v385 = vadd.s32 %v384, 8
        %v386 = vadd.s32 %v384, 16
        %v387 = vadd.s32 %v384, 24
        %v388 = vadd.s32 %v384, 32
        %v389 = vadd.s32 %v384, 40
        %v390 = vadd.s32 %v384, 48
        %v391 = vadd.s32 %v384, 56
        %v392 = vstv %s375
        %v393 = vadd.s32 %v384, %v392
        %v394 = vadd.s32 %v385, %v392
        %v395 = vadd.s32 %v386, %v392
        %v396 = vadd.s32 %v387, %v392
        %v397 = vadd.s32 %v388, %v392
        %v398 = vadd.s32 %v389, %v392
        %v399 = vadd.s32 %v390, %v392
        %v400 = vadd.s32 %v391, %v392
        %v401 = vlaneseq
        %v402 = vand.u32 %v401, 127
        %v403 = vstv %s369
        %v404 = vadd.s32 %v402, %v403
        %vm405 = vcmp.ne.s32.totalorder %v404, %v393
        %vm406 = vcmp.ne.s32.totalorder %v404, %v394
        %vm407 = vcmp.ne.s32.totalorder %v404, %v395
        %vm408 = vcmp.ne.s32.totalorder %v404, %v396
        %vm409 = vcmp.ne.s32.totalorder %v404, %v397
        %vm410 = vcmp.ne.s32.totalorder %v404, %v398
        %vm411 = vcmp.ne.s32.totalorder %v404, %v399
        %vm412 = vcmp.ne.s32.totalorder %v404, %v400
        %vm413 = vcmp.lt.s32.totalorder %v404, 16
        %vm414 = vmand %vm405, %vm413
        %vm415 = vmand %vm406, %vm413
        %vm416 = vmand %vm407, %vm413
        %vm417 = vmand %vm408, %vm413
        %vm418 = vmand %vm409, %vm413
        %vm419 = vmand %vm410, %vm413
        %vm420 = vmand %vm411, %vm413
        %vm421 = vmand %vm412, %vm413
        %v422 = vsel %vm414, %v361, -1e+30
        %v423 = vsel %vm415, %v362, -1e+30
        %v424 = vsel %vm416, %v363, -1e+30
        %v425 = vsel %vm417, %v364, -1e+30
        %v426 = vsel %vm418, %v365, -1e+30
        %v427 = vsel %vm419, %v366, -1e+30
        %v428 = vsel %vm420, %v367, -1e+30
        %v429 = vsel %vm421, %v368, -1e+30
        %v430 = vld [vmem:[#allocation2] sm:$0xff]
        %v431 = vld [vmem:[#allocation2 + $0x8] sm:$0xff]
        %v432 = vld [vmem:[#allocation2 + $0x10] sm:$0xff]
        %v433 = vld [vmem:[#allocation2 + $0x18] sm:$0xff]
        %v434 = vld [vmem:[#allocation2 + $0x20] sm:$0xff]
        %v435 = vld [vmem:[#allocation2 + $0x28] sm:$0xff]
        %v436 = vld [vmem:[#allocation2 + $0x30] sm:$0xff]
        %v437 = vld [vmem:[#allocation2 + $0x38] sm:$0xff]
        %438 = vmax.xlane.f32.xlu0 %v422
        %v439 = vpop.xlane.xlu0 %438
        %440 = vmax.xlane.f32.xlu0 %v423
        %v441 = vpop.xlane.xlu0 %440
        %442 = vmax.xlane.f32.xlu0 %v424
        %v443 = vpop.xlane.xlu0 %442
        %444 = vmax.xlane.f32.xlu0 %v425
        %v445 = vpop.xlane.xlu0 %444
        %446 = vmax.xlane.f32.xlu0 %v426
        %v447 = vpop.xlane.xlu0 %446
        %448 = vmax.xlane.f32.xlu0 %v427
        %v449 = vpop.xlane.xlu0 %448
        %450 = vmax.xlane.f32.xlu0 %v428
        %v451 = vpop.xlane.xlu0 %450
        %452 = vmax.xlane.f32.xlu0 %v429
        %v453 = vpop.xlane.xlu0 %452
        %v454 = vmax.f32 %v430, %v439
        %v455 = vmax.f32 %v431, %v441
        %v456 = vmax.f32 %v432, %v443
        %v457 = vmax.f32 %v433, %v445
        %v458 = vmax.f32 %v434, %v447
        %v459 = vmax.f32 %v435, %v449
        %v460 = vmax.f32 %v436, %v451
        %v461 = vmax.f32 %v437, %v453
        %v462 = vsub.f32 %v430, %v454
        %v463 = vsub.f32 %v431, %v455
        %v464 = vsub.f32 %v432, %v456
        %v465 = vsub.f32 %v433, %v457
        %v466 = vsub.f32 %v434, %v458
        %v467 = vsub.f32 %v435, %v459
        %v468 = vsub.f32 %v436, %v460
        %v469 = vsub.f32 %v437, %v461
        %v470 = vmul.f32 %v462, 1.442695
        %v471 = vpow.pop %v470
        %v472 = vmul.f32 %v463, 1.442695
        %v473 = vpow.pop %v472
        %v474 = vmul.f32 %v464, 1.442695
        %v475 = vpow.pop %v474
        %v476 = vmul.f32 %v465, 1.442695
        %v477 = vpow.pop %v476
        %v478 = vmul.f32 %v466, 1.442695
        %v479 = vpow.pop %v478
        %v480 = vmul.f32 %v467, 1.442695
        %v481 = vpow.pop %v480
        %v482 = vmul.f32 %v468, 1.442695
        %v483 = vpow.pop %v482
        %v484 = vmul.f32 %v469, 1.442695
        %v485 = vpow.pop %v484
        %v486 = vld [vmem:[#allocation3] sm:$0xff]
        %v487 = vld [vmem:[#allocation3 + $0x8] sm:$0xff]
        %v488 = vld [vmem:[#allocation3 + $0x10] sm:$0xff]
        %v489 = vld [vmem:[#allocation3 + $0x18] sm:$0xff]
        %v490 = vld [vmem:[#allocation3 + $0x20] sm:$0xff]
        %v491 = vld [vmem:[#allocation3 + $0x28] sm:$0xff]
        %v492 = vld [vmem:[#allocation3 + $0x30] sm:$0xff]
        %v493 = vld [vmem:[#allocation3 + $0x38] sm:$0xff]
        %v494 = vmul.f32 %v471, %v486
        %v495 = vmul.f32 %v473, %v487
        %v496 = vmul.f32 %v475, %v488
        %v497 = vmul.f32 %v477, %v489
        %v498 = vmul.f32 %v479, %v490
        %v499 = vmul.f32 %v481, %v491
        %v500 = vmul.f32 %v483, %v492
        %v501 = vmul.f32 %v485, %v493
        %503 = vset.pattern.permute.xlu0 0
        %504 = vperm.xlu0 %503, %v454
        %v505 = vpop.permute.xlu0 %504
        %508 = vset.pattern.permute.xlu0 0
        %509 = vperm.xlu0 %508, %v455
        %v510 = vpop.permute.xlu0 %509
        %513 = vset.pattern.permute.xlu0 0
        %514 = vperm.xlu0 %513, %v456
        %v515 = vpop.permute.xlu0 %514
        %518 = vset.pattern.permute.xlu0 0
        %519 = vperm.xlu0 %518, %v457
        %v520 = vpop.permute.xlu0 %519
        %523 = vset.pattern.permute.xlu0 0
        %524 = vperm.xlu0 %523, %v458
        %v525 = vpop.permute.xlu0 %524
        %528 = vset.pattern.permute.xlu0 0
        %529 = vperm.xlu0 %528, %v459
        %v530 = vpop.permute.xlu0 %529
        %533 = vset.pattern.permute.xlu0 0
        %534 = vperm.xlu0 %533, %v460
        %v535 = vpop.permute.xlu0 %534
        %538 = vset.pattern.permute.xlu0 0
        %539 = vperm.xlu0 %538, %v461
        %v540 = vpop.permute.xlu0 %539
        %v542 = vsub.f32 %v422, %v505
        %v543 = vsub.f32 %v423, %v510
        %v544 = vsub.f32 %v424, %v515
        %v545 = vsub.f32 %v425, %v520
        %v546 = vsub.f32 %v426, %v525
        %v547 = vsub.f32 %v427, %v530
        %v548 = vsub.f32 %v428, %v535
        %v549 = vsub.f32 %v429, %v540
        %v550 = vmul.f32 %v542, 1.442695
        %v551 = vpow.pop %v550
        %v552 = vmul.f32 %v543, 1.442695
        %v553 = vpow.pop %v552
        %v554 = vmul.f32 %v544, 1.442695
        %v555 = vpow.pop %v554
        %v556 = vmul.f32 %v545, 1.442695
        %v557 = vpow.pop %v556
        %v558 = vmul.f32 %v546, 1.442695
        %v559 = vpow.pop %v558
        %v560 = vmul.f32 %v547, 1.442695
        %v561 = vpow.pop %v560
        %v562 = vmul.f32 %v548, 1.442695
        %v563 = vpow.pop %v562
        %v564 = vmul.f32 %v549, 1.442695
        %v565 = vpow.pop %v564
        %566 = vadd.xlane.f32.xlu0 %v551
        %v567 = vpop.xlane.xlu0 %566
        %568 = vadd.xlane.f32.xlu0 %v553
        %v569 = vpop.xlane.xlu0 %568
        %570 = vadd.xlane.f32.xlu0 %v555
        %v571 = vpop.xlane.xlu0 %570
        %572 = vadd.xlane.f32.xlu0 %v557
        %v573 = vpop.xlane.xlu0 %572
        %574 = vadd.xlane.f32.xlu0 %v559
        %v575 = vpop.xlane.xlu0 %574
        %576 = vadd.xlane.f32.xlu0 %v561
        %v577 = vpop.xlane.xlu0 %576
        %578 = vadd.xlane.f32.xlu0 %v563
        %v579 = vpop.xlane.xlu0 %578
        %580 = vadd.xlane.f32.xlu0 %v565
        %v581 = vpop.xlane.xlu0 %580
        %v582 = vadd.f32 %v494, %v567
        %v583 = vadd.f32 %v495, %v569
        %v584 = vadd.f32 %v496, %v571
        %v585 = vadd.f32 %v497, %v573
        %v586 = vadd.f32 %v498, %v575
        %v587 = vadd.f32 %v499, %v577
        %v588 = vadd.f32 %v500, %v579
        %v589 = vadd.f32 %v501, %v581
        %vm590 = vcmask 7168
        %591 = vst.msk [vmem:[#allocation3] sm:$0xff] %vm590, %v582
        %592 = vst.msk [vmem:[#allocation3 + $0x8] sm:$0xff] %vm590, %v583
        %593 = vst.msk [vmem:[#allocation3 + $0x10] sm:$0xff] %vm590, %v584
        %594 = vst.msk [vmem:[#allocation3 + $0x18] sm:$0xff] %vm590, %v585
        %595 = vst.msk [vmem:[#allocation3 + $0x20] sm:$0xff] %vm590, %v586
        %596 = vst.msk [vmem:[#allocation3 + $0x28] sm:$0xff] %vm590, %v587
        %597 = vst.msk [vmem:[#allocation3 + $0x30] sm:$0xff] %vm590, %v588
        %598 = vst.msk [vmem:[#allocation3 + $0x38] sm:$0xff] %vm590, %v589
        %599 = vst.msk [vmem:[#allocation2] sm:$0xff] %vm590, %v454
        %600 = vst.msk [vmem:[#allocation2 + $0x8] sm:$0xff] %vm590, %v455
        %601 = vst.msk [vmem:[#allocation2 + $0x10] sm:$0xff] %vm590, %v456
        %602 = vst.msk [vmem:[#allocation2 + $0x18] sm:$0xff] %vm590, %v457
        %603 = vst.msk [vmem:[#allocation2 + $0x20] sm:$0xff] %vm590, %v458
        %604 = vst.msk [vmem:[#allocation2 + $0x28] sm:$0xff] %vm590, %v459
        %605 = vst.msk [vmem:[#allocation2 + $0x30] sm:$0xff] %vm590, %v460
        %606 = vst.msk [vmem:[#allocation2 + $0x38] sm:$0xff] %vm590, %v461
      $region36: #{simclr_loss.1} parent=27 // pred_fallthru
        _
      %p607 = pneg %p379
      // Predicated region
      $region37: #{simclr_loss.1} parent=27 // pred_check
        _
      $region38: #{simclr_loss.1} parent=27 // pred_check_branch
        %609 = sbr.rel (%p379) target = $region40
      $region39: #{simclr_loss.1} parent=27 // pred_region
        %v610 = vld [vmem:[#allocation2] sm:$0xff]
        %v611 = vld [vmem:[#allocation2 + $0x8] sm:$0xff]
        %v612 = vld [vmem:[#allocation2 + $0x10] sm:$0xff]
        %v613 = vld [vmem:[#allocation2 + $0x18] sm:$0xff]
        %v614 = vld [vmem:[#allocation2 + $0x20] sm:$0xff]
        %v615 = vld [vmem:[#allocation2 + $0x28] sm:$0xff]
        %v616 = vld [vmem:[#allocation2 + $0x30] sm:$0xff]
        %v617 = vld [vmem:[#allocation2 + $0x38] sm:$0xff]
        %618 = vmax.xlane.f32.xlu0 %v361
        %v619 = vpop.xlane.xlu0 %618
        %620 = vmax.xlane.f32.xlu0 %v362
        %v621 = vpop.xlane.xlu0 %620
        %622 = vmax.xlane.f32.xlu0 %v363
        %v623 = vpop.xlane.xlu0 %622
        %624 = vmax.xlane.f32.xlu0 %v364
        %v625 = vpop.xlane.xlu0 %624
        %626 = vmax.xlane.f32.xlu0 %v365
        %v627 = vpop.xlane.xlu0 %626
        %628 = vmax.xlane.f32.xlu0 %v366
        %v629 = vpop.xlane.xlu0 %628
        %630 = vmax.xlane.f32.xlu0 %v367
        %v631 = vpop.xlane.xlu0 %630
        %632 = vmax.xlane.f32.xlu0 %v368
        %v633 = vpop.xlane.xlu0 %632
        %v634 = vmax.f32 %v610, %v619
        %v635 = vmax.f32 %v611, %v621
        %v636 = vmax.f32 %v612, %v623
        %v637 = vmax.f32 %v613, %v625
        %v638 = vmax.f32 %v614, %v627
        %v639 = vmax.f32 %v615, %v629
        %v640 = vmax.f32 %v616, %v631
        %v641 = vmax.f32 %v617, %v633
        %v642 = vsub.f32 %v610, %v634
        %v643 = vsub.f32 %v611, %v635
        %v644 = vsub.f32 %v612, %v636
        %v645 = vsub.f32 %v613, %v637
        %v646 = vsub.f32 %v614, %v638
        %v647 = vsub.f32 %v615, %v639
        %v648 = vsub.f32 %v616, %v640
        %v649 = vsub.f32 %v617, %v641
        %v650 = vmul.f32 %v642, 1.442695
        %v651 = vpow.pop %v650
        %v652 = vmul.f32 %v643, 1.442695
        %v653 = vpow.pop %v652
        %v654 = vmul.f32 %v644, 1.442695
        %v655 = vpow.pop %v654
        %v656 = vmul.f32 %v645, 1.442695
        %v657 = vpow.pop %v656
        %v658 = vmul.f32 %v646, 1.442695
        %v659 = vpow.pop %v658
        %v660 = vmul.f32 %v647, 1.442695
        %v661 = vpow.pop %v660
        %v662 = vmul.f32 %v648, 1.442695
        %v663 = vpow.pop %v662
        %v664 = vmul.f32 %v649, 1.442695
        %v665 = vpow.pop %v664
        %v666 = vld [vmem:[#allocation3] sm:$0xff]
        %v667 = vld [vmem:[#allocation3 + $0x8] sm:$0xff]
        %v668 = vld [vmem:[#allocation3 + $0x10] sm:$0xff]
        %v669 = vld [vmem:[#allocation3 + $0x18] sm:$0xff]
        %v670 = vld [vmem:[#allocation3 + $0x20] sm:$0xff]
        %v671 = vld [vmem:[#allocation3 + $0x28] sm:$0xff]
        %v672 = vld [vmem:[#allocation3 + $0x30] sm:$0xff]
        %v673 = vld [vmem:[#allocation3 + $0x38] sm:$0xff]
        %v674 = vmul.f32 %v651, %v666
        %v675 = vmul.f32 %v653, %v667
        %v676 = vmul.f32 %v655, %v668
        %v677 = vmul.f32 %v657, %v669
        %v678 = vmul.f32 %v659, %v670
        %v679 = vmul.f32 %v661, %v671
        %v680 = vmul.f32 %v663, %v672
        %v681 = vmul.f32 %v665, %v673
        %683 = vset.pattern.permute.xlu0 0
        %684 = vperm.xlu0 %683, %v634
        %v685 = vpop.permute.xlu0 %684
        %688 = vset.pattern.permute.xlu0 0
        %689 = vperm.xlu0 %688, %v635
        %v690 = vpop.permute.xlu0 %689
        %693 = vset.pattern.permute.xlu0 0
        %694 = vperm.xlu0 %693, %v636
        %v695 = vpop.permute.xlu0 %694
        %698 = vset.pattern.permute.xlu0 0
        %699 = vperm.xlu0 %698, %v637
        %v700 = vpop.permute.xlu0 %699
        %703 = vset.pattern.permute.xlu0 0
        %704 = vperm.xlu0 %703, %v638
        %v705 = vpop.permute.xlu0 %704
        %708 = vset.pattern.permute.xlu0 0
        %709 = vperm.xlu0 %708, %v639
        %v710 = vpop.permute.xlu0 %709
        %713 = vset.pattern.permute.xlu0 0
        %714 = vperm.xlu0 %713, %v640
        %v715 = vpop.permute.xlu0 %714
        %718 = vset.pattern.permute.xlu0 0
        %719 = vperm.xlu0 %718, %v641
        %v720 = vpop.permute.xlu0 %719
        %v722 = vsub.f32 %v361, %v685
        %v723 = vsub.f32 %v362, %v690
        %v724 = vsub.f32 %v363, %v695
        %v725 = vsub.f32 %v364, %v700
        %v726 = vsub.f32 %v365, %v705
        %v727 = vsub.f32 %v366, %v710
        %v728 = vsub.f32 %v367, %v715
        %v729 = vsub.f32 %v368, %v720
        %v730 = vmul.f32 %v722, 1.442695
        %v731 = vpow.pop %v730
        %v732 = vmul.f32 %v723, 1.442695
        %v733 = vpow.pop %v732
        %v734 = vmul.f32 %v724, 1.442695
        %v735 = vpow.pop %v734
        %v736 = vmul.f32 %v725, 1.442695
        %v737 = vpow.pop %v736
        %v738 = vmul.f32 %v726, 1.442695
        %v739 = vpow.pop %v738
        %v740 = vmul.f32 %v727, 1.442695
        %v741 = vpow.pop %v740
        %v742 = vmul.f32 %v728, 1.442695
        %v743 = vpow.pop %v742
        %v744 = vmul.f32 %v729, 1.442695
        %v745 = vpow.pop %v744
        %746 = vadd.xlane.f32.xlu0 %v731
        %v747 = vpop.xlane.xlu0 %746
        %748 = vadd.xlane.f32.xlu0 %v733
        %v749 = vpop.xlane.xlu0 %748
        %750 = vadd.xlane.f32.xlu0 %v735
        %v751 = vpop.xlane.xlu0 %750
        %752 = vadd.xlane.f32.xlu0 %v737
        %v753 = vpop.xlane.xlu0 %752
        %754 = vadd.xlane.f32.xlu0 %v739
        %v755 = vpop.xlane.xlu0 %754
        %756 = vadd.xlane.f32.xlu0 %v741
        %v757 = vpop.xlane.xlu0 %756
        %758 = vadd.xlane.f32.xlu0 %v743
        %v759 = vpop.xlane.xlu0 %758
        %760 = vadd.xlane.f32.xlu0 %v745
        %v761 = vpop.xlane.xlu0 %760
        %v762 = vadd.f32 %v674, %v747
        %v763 = vadd.f32 %v675, %v749
        %v764 = vadd.f32 %v676, %v751
        %v765 = vadd.f32 %v677, %v753
        %v766 = vadd.f32 %v678, %v755
        %v767 = vadd.f32 %v679, %v757
        %v768 = vadd.f32 %v680, %v759
        %v769 = vadd.f32 %v681, %v761
        %vm770 = vcmask 7168
        %771 = vst.msk [vmem:[#allocation3] sm:$0xff] %vm770, %v762
        %772 = vst.msk [vmem:[#allocation3 + $0x8] sm:$0xff] %vm770, %v763
        %773 = vst.msk [vmem:[#allocation3 + $0x10] sm:$0xff] %vm770, %v764
        %774 = vst.msk [vmem:[#allocation3 + $0x18] sm:$0xff] %vm770, %v765
        %775 = vst.msk [vmem:[#allocation3 + $0x20] sm:$0xff] %vm770, %v766
        %776 = vst.msk [vmem:[#allocation3 + $0x28] sm:$0xff] %vm770, %v767
        %777 = vst.msk [vmem:[#allocation3 + $0x30] sm:$0xff] %vm770, %v768
        %778 = vst.msk [vmem:[#allocation3 + $0x38] sm:$0xff] %vm770, %v769
        %779 = vst.msk [vmem:[#allocation2] sm:$0xff] %vm770, %v634
        %780 = vst.msk [vmem:[#allocation2 + $0x8] sm:$0xff] %vm770, %v635
        %781 = vst.msk [vmem:[#allocation2 + $0x10] sm:$0xff] %vm770, %v636
        %782 = vst.msk [vmem:[#allocation2 + $0x18] sm:$0xff] %vm770, %v637
        %783 = vst.msk [vmem:[#allocation2 + $0x20] sm:$0xff] %vm770, %v638
        %784 = vst.msk [vmem:[#allocation2 + $0x28] sm:$0xff] %vm770, %v639
        %785 = vst.msk [vmem:[#allocation2 + $0x30] sm:$0xff] %vm770, %v640
        %786 = vst.msk [vmem:[#allocation2 + $0x38] sm:$0xff] %vm770, %v641
      $region40: #{simclr_loss.1} parent=27 // pred_fallthru
        _
      // Predicated region
      $region41: #{simclr_loss.1} parent=27 // pred_check
        %p787 = pneg %p179
      $region42: #{simclr_loss.1} parent=27 // pred_check_branch
        %789 = sbr.rel (%p787) target = $region44
      $region43: #{simclr_loss.1} parent=27 // pred_region
        %v790 = vld [vmem:[#allocation2] sm:$0xff]
        %v791 = vld [vmem:[#allocation2 + $0x8] sm:$0xff]
        %v792 = vld [vmem:[#allocation2 + $0x10] sm:$0xff]
        %v793 = vld [vmem:[#allocation2 + $0x18] sm:$0xff]
        %v794 = vld [vmem:[#allocation2 + $0x20] sm:$0xff]
        %v795 = vld [vmem:[#allocation2 + $0x28] sm:$0xff]
        %v796 = vld [vmem:[#allocation2 + $0x30] sm:$0xff]
        %v797 = vld [vmem:[#allocation2 + $0x38] sm:$0xff]
        %v798 = vld [vmem:[#allocation3] sm:$0xff]
        %v799 = vld [vmem:[#allocation3 + $0x8] sm:$0xff]
        %v800 = vld [vmem:[#allocation3 + $0x10] sm:$0xff]
        %v801 = vld [vmem:[#allocation3 + $0x18] sm:$0xff]
        %v802 = vld [vmem:[#allocation3 + $0x20] sm:$0xff]
        %v803 = vld [vmem:[#allocation3 + $0x28] sm:$0xff]
        %v804 = vld [vmem:[#allocation3 + $0x30] sm:$0xff]
        %v805 = vld [vmem:[#allocation3 + $0x38] sm:$0xff]
        %v806 = vlog2.pop %v798
        %v807 = vmul.f32 %v806, 0.6931472
        %v808 = vlog2.pop %v799
        %v809 = vmul.f32 %v808, 0.6931472
        %v810 = vlog2.pop %v800
        %v811 = vmul.f32 %v810, 0.6931472
        %v812 = vlog2.pop %v801
        %v813 = vmul.f32 %v812, 0.6931472
        %v814 = vlog2.pop %v802
        %v815 = vmul.f32 %v814, 0.6931472
        %v816 = vlog2.pop %v803
        %v817 = vmul.f32 %v816, 0.6931472
        %v818 = vlog2.pop %v804
        %v819 = vmul.f32 %v818, 0.6931472
        %v820 = vlog2.pop %v805
        %v821 = vmul.f32 %v820, 0.6931472
        %v822 = vadd.f32 %v790, %v807
        %v823 = vadd.f32 %v791, %v809
        %v824 = vadd.f32 %v792, %v811
        %v825 = vadd.f32 %v793, %v813
        %v826 = vadd.f32 %v794, %v815
        %v827 = vadd.f32 %v795, %v817
        %v828 = vadd.f32 %v796, %v819
        %v829 = vadd.f32 %v797, %v821
        %v830 = vlaneseq
        %v831 = vshrl.u32 %v830, 7
        %v832 = vadd.s32 %v831, 8
        %v833 = vadd.s32 %v831, 16
        %v834 = vadd.s32 %v831, 24
        %v835 = vadd.s32 %v831, 32
        %v836 = vadd.s32 %v831, 40
        %v837 = vadd.s32 %v831, 48
        %v838 = vadd.s32 %v831, 56
        %v839 = vstv %s375
        %v840 = vadd.s32 %v831, %v839
        %v841 = vadd.s32 %v832, %v839
        %v842 = vadd.s32 %v833, %v839
        %v843 = vadd.s32 %v834, %v839
        %v844 = vadd.s32 %v835, %v839
        %v845 = vadd.s32 %v836, %v839
        %v846 = vadd.s32 %v837, %v839
        %v847 = vadd.s32 %v838, %v839
        %vm848 = vcmp.lt.s32.totalorder %v840, 16
        %vm849 = vcmp.lt.s32.totalorder %v841, 16
        %vm850 = vcmp.lt.s32.totalorder %v842, 16
        %vm851 = vcmp.lt.s32.totalorder %v843, 16
        %vm852 = vcmp.lt.s32.totalorder %v844, 16
        %vm853 = vcmp.lt.s32.totalorder %v845, 16
        %vm854 = vcmp.lt.s32.totalorder %v846, 16
        %vm855 = vcmp.lt.s32.totalorder %v847, 16
        %v856 = vsel %vm848, %v822, 0.0
        %v857 = vsel %vm849, %v823, 0.0
        %v858 = vsel %vm850, %v824, 0.0
        %v859 = vsel %vm851, %v825, 0.0
        %v860 = vsel %vm852, %v826, 0.0
        %v861 = vsel %vm853, %v827, 0.0
        %v862 = vsel %vm854, %v828, 0.0
        %v863 = vsel %vm855, %v829, 0.0
        %vm864 = vcmask 7168
        %v865 = vsel %vm864, %v856, 0.0
        %v866 = vsel %vm864, %v857, 0.0
        %v867 = vadd.f32 %v865, %v866
        %v868 = vsel %vm864, %v858, 0.0
        %v869 = vadd.f32 %v867, %v868
        %v870 = vsel %vm864, %v859, 0.0
        %v871 = vadd.f32 %v869, %v870
        %v872 = vsel %vm864, %v860, 0.0
        %v873 = vadd.f32 %v871, %v872
        %v874 = vsel %vm864, %v861, 0.0
        %v875 = vadd.f32 %v873, %v874
        %v876 = vsel %vm864, %v862, 0.0
        %v877 = vadd.f32 %v875, %v876
        %v878 = vsel %vm864, %v863, 0.0
        %v879 = vadd.f32 %v877, %v878
        %880 = vadd.xlane.f32.xlu0 %v879
        %v881 = vpop.xlane.xlu0 %880
        %v882 = vrot.slane %v881, 4
        %v883 = vadd.f32 %v881, %v882
        %v884 = vrot.slane %v883, 2
        %v885 = vadd.f32 %v883, %v884
        %v886 = vrot.slane %v885, 1
        %v887 = vadd.f32 %v885, %v886
        %s888 = vtos %v887
        %v889 = vstv %s888
        %890 = vst [vmem:[%s177] sm:$0xff] %v889
      $region44: #{simclr_loss.1} parent=27 // pred_fallthru
        _
      %p891 = scmp.lt.s32.totalorder %s17, 1
      %s892 = scalar_select %p891, %s17, 1
      %s893 = smul.addr %s892, 8
      %s894 = scalar_lea.vmem %s2, %s893
      // Predicated region
      $region45: #{simclr_loss.1} parent=27 // pred_check
        %p895 = pneg %p95
      $region46: #{simclr_loss.1} parent=27 // pred_check_branch
        %897 = sbr.rel (%p895) target = $region48
      $region47: #{simclr_loss.1} parent=27 // pred_region
        _
      $region48: #{simclr_loss.1} parent=27 // pred_fallthru
        _
    $region28: #{simclr_loss.1} parent=5 // pred_fallthru
      _
    %p898 = scmp.le.s32.totalorder 2, %s8
    // Predicated region
    $region49: #{simclr_loss.1} parent=5 // pred_check
      %p899 = pneg %p898
    $region50: #{simclr_loss.1} parent=5 // pred_check_branch
      %901 = sbr.rel (%p899) target = $region52
    $region51: #{simclr_loss.1} parent=5 // pred_region
      %s902 = ssub.s32 %s8, 2
      // Predicated region
      $region53: #{simclr_loss.1} parent=51 // pred_check
        %p903 = pneg %p101
      $region54: #{simclr_loss.1} parent=51 // pred_check_branch
        %905 = sbr.rel (%p903) target = $region56
      $region55: #{simclr_loss.1} parent=51 // pred_region
        %p906 = scmp.lt.s32.totalorder %s19, 1
        %s907 = scalar_select %p906, %s19, 1
        %s908 = smul.addr %s907, 8
        %s909 = scalar_lea.vmem %s2, %s908
      $region56: #{simclr_loss.1} parent=51 // pred_fallthru
        _
    $region52: #{simclr_loss.1} parent=5 // pred_fallthru
      _
  $region6: #{simclr_loss.1} parent=0 // loop_footer
    %s12 = sadd.s32 1, %s8
  $region7: #{simclr_loss.1} parent=0 // loop_footer_branch
    %7 = sbr.rel target = $region3
  $region8: #{simclr_loss.1} parent=0 // loop_exit
    _

</llo_original>
